<compile_context>
chip_gen: v6e
topology: v6e:2x2x1
jax: 0.10.0
libtpu: 0.0.40
codegen_flags: <defaults>
</compile_context>

<pallas_src>
import jax
import jax.numpy as jnp
from jax.experimental import pallas as pl
from jax.experimental.pallas import tpu as pltpu


def _wavg_softmax_kernel(x_ref, w_ref, b_ref, o_ref):
    # x_ref: (nb, MC, T)  ensemble channels (sublanes) x pixels (lanes)
    # w_ref: (C, MC)      1x1-conv weight (PyTorch (C, M*C, 1, 1) squeezed)
    # b_ref: (C, 1)       bias
    # o_ref: (nb, C, T)   per-pixel softmax probabilities over the C rows
    w = w_ref[...].astype(jnp.float32)
    b = b_ref[...].astype(jnp.float32)
    nb = x_ref.shape[0]
    for i in range(nb):                                 # static unroll; nb is small
        x = x_ref[i].astype(jnp.float32)                # (MC, T)
        # 1x1 conv as a single MXU contraction: (C,MC)@(MC,T) -> (C,T).
        logits = jnp.dot(w, x, preferred_element_type=jnp.float32) + b
        # Channel softmax: reduction over the tiny C sublane rows (XLU).
        m = jnp.max(logits, axis=0, keepdims=True)      # (1, T)
        e = jnp.exp(logits - m)                         # (C, T)
        denom = jnp.sum(e, axis=0, keepdims=True)       # (1, T)
        # EUP approx reciprocal: own bundle slot, ~1e-3 probability error.
        o_ref[i] = (e * pl.reciprocal(denom, approx=True)).astype(o_ref.dtype)


def _padded_rows(rows, itemsize):
    # Sub-32-bit dtypes pack along sublanes: 8 rows for 32-bit, 16 for 16-bit.
    sub = 8 * max(1, 4 // itemsize)
    return -(-rows // sub) * sub


def _choose_tiling(n, hw, mc, c, in_itemsize, out_itemsize, tile_hw):
    """Pick (images/step nb, pixels/step tile) under a VMEM budget, preferring
    tiles that divide hw exactly and keeping >=2 grid steps when possible."""
    # Double-buffered per-pixel VMEM cost of the x and out blocks.
    bpp = 2 * (_padded_rows(mc, in_itemsize) * in_itemsize
               + _padded_rows(c, out_itemsize) * out_itemsize)
    vmem_budget = 40 << 20        # conservative across v5e/v6e (128 MiB) and v7x (64 MiB)
    max_pixels = max(128, (vmem_budget // bpp) // 128 * 128)
    req = max(128, min(tile_hw, max_pixels))

    if hw <= req:
        tile = hw                                       # full extent (always legal)
        nb = max(1, min(n, req // max(hw, 1)))          # small-HW regime: pack images
        # Keep at least 2 grid steps when possible so both v7x TCs get work.
        while nb > 1 and -(-n // nb) < 2:
            nb //= 2
    else:
        nb = 1
        req = (req // 128) * 128
        tile = req
        if hw % 128 == 0:
            # Largest multiple-of-128 divisor of hw that fits: no ragged last tile.
            q = hw // 128
            for f in range(min(q, req // 128), 0, -1):
                if q % f == 0:
                    tile = f * 128
                    break
        # else: ragged last tile is handled by Pallas boundary masking.
    return nb, tile, bpp


def _default_tile_hw():
    # v7x HBM (~3.2 TB/s) makes the fixed per-step overhead proportionally
    # larger, so default to bigger tiles there.
    try:
        kind = jax.devices()[0].device_kind.lower()
        if "v7" in kind:
            return 65536
    except Exception:
        pass
    return 32768


def ensemble_wavg_forward(feats_nchw, avg_weight, avg_bias, *,
                          tile_hw=None, buffer_count=None):
    """feats_nchw: (N, M*C, H, W) concatenated model outputs (NCHW); dtype is
    passed through (keep bf16 at the HBM boundary if the members emit bf16).
    avg_weight:  (C, M*C) 1x1-conv weight (PyTorch (C, M*C, 1, 1) squeezed).
    avg_bias:    (C,) bias.
    Returns per-pixel class probabilities in NCHW: (N, C, H, W)."""
    N, MC, H, W = feats_nchw.shape
    C = avg_weight.shape[0]
    HW = H * W
    if tile_hw is None:
        tile_hw = _default_tile_hw()

    in_sz = jnp.dtype(feats_nchw.dtype).itemsize
    out_sz = in_sz
    nb, tile, bpp = _choose_tiling(N, HW, MC, C, in_sz, out_sz, tile_hw)

    x = feats_nchw.reshape(N, MC, HW)        # free reshape, no HBM transpose pass
    w = avg_weight                           # (C, MC)
    b = avg_bias.reshape(C, 1)               # (C, 1)

    grid = (pl.cdiv(N, nb), pl.cdiv(HW, tile))

    x_spec_kwargs = {}
    if buffer_count is not None:
        # Optional deeper pipelining knob if a profile still shows exposed DMA.
        x_spec_kwargs["pipeline_mode"] = pl.Buffered(buffer_count)
    in_specs = [
        pl.BlockSpec((nb, MC, tile), lambda bi, j: (bi, 0, j), **x_spec_kwargs),
        pl.BlockSpec((C, MC), lambda bi, j: (0, 0)),
        pl.BlockSpec((C, 1), lambda bi, j: (0, 0)),
    ]
    out_specs = pl.BlockSpec((nb, C, tile), lambda bi, j: (bi, 0, j))

    # Raise the scoped VMEM limit only when the double-buffered working set of
    # large tiles needs it; keep headroom under v7x's 64 MiB physical VMEM.
    vmem_est = bpp * tile * nb + 2 * 4 * (C * MC + C)
    compiler_kwargs = dict(dimension_semantics=("parallel", "parallel"))
    if vmem_est > (24 << 20):
        compiler_kwargs["vmem_limit_bytes"] = int(min(vmem_est * 3 // 2, 56 << 20))

    # Advisory cost hint: this kernel is memory-bound; lets XLA schedule the
    # surrounding (compute-heavy) ensemble-member work to overlap with it.
    cost = pl.CostEstimate(
        flops=int(2 * C * MC * N * HW + 6 * C * N * HW),
        transcendentals=int((C + 1) * N * HW),
        bytes_accessed=int(N * HW * (MC * in_sz + C * out_sz) + 4 * (C * MC + C)),
    )

    out = pl.pallas_call(
        _wavg_softmax_kernel,
        out_shape=jax.ShapeDtypeStruct((N, C, HW), feats_nchw.dtype),
        grid_spec=pltpu.PrefetchScalarGridSpec(
            num_scalar_prefetch=0,
            grid=grid,
            in_specs=in_specs,
            out_specs=out_specs,
        ),
        compiler_params=pltpu.CompilerParams(**compiler_kwargs),
        cost_estimate=cost,
    )(x, w, b)

    return out.reshape(N, C, H, W)           # free reshape back to NCHW


def _make_submodel_params(key, num_models, in_ch, num_classes):
    """Deterministic stand-in 'models': each is a 1x1 conv in_ch -> num_classes."""
    params = []
    for i in range(num_models):
        kw, kb, key = jax.random.split(jax.random.fold_in(key, i), 3)
        w = jax.random.normal(kw, (num_classes, in_ch), dtype=jnp.float32) * 0.1
        b = jax.random.normal(kb, (num_classes,), dtype=jnp.float32) * 0.01
        params.append((w, b))
    return params


def _run_submodels(x_nchw, params):
    """Plain-JAX glue computing each stand-in model's logits and concatenating
    along the channel dim (matches torch.cat(..., dim=1)); stays in NCHW."""
    outs = []
    for (w, b) in params:
        y = jnp.einsum("nchw,kc->nkhw", x_nchw, w) + b[None, :, None, None]
        outs.append(y)
    return jnp.concatenate(outs, axis=1)      # (N, M*C, H, W)


if __name__ == "__main__":
    key = jax.random.PRNGKey(0)

    # Small shapes consistent with the module's forward.
    N, Cin, H, W = 2, 4, 16, 16
    num_models = 3
    num_classes = 4

    k_in, k_models, k_w, k_b = jax.random.split(key, 4)
    x_in = jax.random.normal(k_in, (N, Cin, H, W), dtype=jnp.float32)

    # Stand-in ensemble members (softmax disabled, as in the PyTorch module).
    sub_params = _make_submodel_params(k_models, num_models, Cin, num_classes)
    feats = _run_submodels(x_in, sub_params)               # (N, M*C, H, W)

    def reference(feats_nchw, w, b):
        logits = jnp.einsum("nkhw,ck->nchw", feats_nchw, w,
                            precision=jax.lax.Precision.HIGHEST)
        logits = logits + b[None, :, None, None]
        return jax.nn.softmax(logits, axis=1)

    # EUP approx reciprocal in the softmax denominator -> ~1e-3 probability error.
    TOL = 1e-2

    # --- Check 1: module-faithful weights (init_wavg_weights: w=1.0, b=0.0) ---
    avg_weight = jnp.ones((num_classes, num_models * num_classes), dtype=jnp.float32)
    avg_bias = jnp.zeros((num_classes,), dtype=jnp.float32)
    out = jax.block_until_ready(ensemble_wavg_forward(feats, avg_weight, avg_bias))
    ref = reference(feats, avg_weight, avg_bias)
    assert out.shape == (N, num_classes, H, W)
    assert jnp.allclose(out, ref, atol=TOL, rtol=TOL)
    assert jnp.allclose(jnp.sum(out, axis=1), 1.0, atol=TOL)

    # --- Check 2: generic (random) weights exercise the non-degenerate path ---
    avg_weight2 = jax.random.normal(
        k_w, (num_classes, num_models * num_classes), dtype=jnp.float32) * 0.5
    avg_bias2 = jax.random.normal(k_b, (num_classes,), dtype=jnp.float32) * 0.1
    out2 = jax.block_until_ready(ensemble_wavg_forward(feats, avg_weight2, avg_bias2))
    ref2 = reference(feats, avg_weight2, avg_bias2)
    assert jnp.allclose(out2, ref2, atol=TOL, rtol=TOL)
    assert jnp.allclose(jnp.sum(out2, axis=1), 1.0, atol=TOL)

    # --- Check 3: multi-tile spatial path (H*W split into two 128-pixel tiles) ---
    out3 = jax.block_until_ready(
        ensemble_wavg_forward(feats, avg_weight2, avg_bias2, tile_hw=128))
    assert jnp.allclose(out3, ref2, atol=TOL, rtol=TOL)

    # --- Check 4: small-HW batch-packing path (nb=2 images per grid step) ---
    feats4 = jnp.concatenate([feats, feats * 0.5], axis=0)      # (4, M*C, H, W)
    out4 = jax.block_until_ready(
        ensemble_wavg_forward(feats4, avg_weight2, avg_bias2, tile_hw=512))
    ref4 = reference(feats4, avg_weight2, avg_bias2)
    assert jnp.allclose(out4, ref4, atol=TOL, rtol=TOL)

    # --- Check 5: bf16 at the HBM boundary (no wrapper upcast; f32 math inside) ---
    out_bf = jax.block_until_ready(
        ensemble_wavg_forward(feats.astype(jnp.bfloat16), avg_weight2, avg_bias2))
    assert out_bf.dtype == jnp.bfloat16
    assert jnp.allclose(out_bf.astype(jnp.float32), ref2, atol=5e-2, rtol=5e-2)

    print("KERNEL_OK")
</pallas_src>

<mosaic_0001>
module attributes {stable_mosaic.version = 11 : i64} {
  func.func @_wavg_softmax_kernel(%arg0: i32, %arg1: i32, %arg2: memref<1x12x256xf32, #tpu.memory_space<vmem>>, %arg3: memref<4x12xf32, #tpu.memory_space<vmem>>, %arg4: memref<4x1xf32, #tpu.memory_space<vmem>>, %arg5: memref<1x4x256xf32, #tpu.memory_space<vmem>>) attributes {dimension_semantics = [#tpu.dimension_semantics<parallel>, #tpu.dimension_semantics<parallel>], iteration_bounds = array<i64: 2, 1>, scalar_prefetch = 0 : i64, scratch_operands = 0 : i64, tpu.core_type = #tpu.core_type<tc>, window_params = [{transform_indices = @transform_0, window_bounds = array<i64: 1, 12, 256>}, {pipeline_mode = #tpu.pipeline_mode<synchronous>, transform_indices = @transform_1, window_bounds = array<i64: 4, 12>}, {pipeline_mode = #tpu.pipeline_mode<synchronous>, transform_indices = @transform_2, window_bounds = array<i64: 4, 1>}, {transform_indices = @transform_3, window_bounds = array<i64: 1, 4, 256>}]} {
    %c0 = arith.constant 0 : index
    %c0_0 = arith.constant 0 : index
    %0 = vector.load %arg3[%c0, %c0_0] : memref<4x12xf32, #tpu.memory_space<vmem>>, vector<4x12xf32>
    %c0_1 = arith.constant 0 : index
    %c0_2 = arith.constant 0 : index
    %1 = vector.load %arg4[%c0_1, %c0_2] : memref<4x1xf32, #tpu.memory_space<vmem>>, vector<4x1xf32>
    %c0_3 = arith.constant 0 : index
    %c0_4 = arith.constant 0 : index
    %c0_5 = arith.constant 0 : index
    %2 = vector.load %arg2[%c0_3, %c0_4, %c0_5] : memref<1x12x256xf32, #tpu.memory_space<vmem>>, vector<1x12x256xf32>
    %3 = vector.shape_cast %2 : vector<1x12x256xf32> to vector<12x256xf32>
    %cst = arith.constant dense<0.000000e+00> : vector<4x256xf32>
    %4 = tpu.matmul %0, %3, %cst {dimension_numbers = #tpu.dot_dimension_numbers<[1], [0], [0], [1], [0, 0, 1, 1], [], []>} : vector<4x12xf32>, vector<12x256xf32>, vector<4x256xf32> -> vector<4x256xf32>
    %5 = vector.broadcast %1 : vector<4x1xf32> to vector<4x256xf32>
    %6 = arith.addf %4, %5 : vector<4x256xf32>
    %cst_6 = arith.constant dense<0xFF800000> : vector<256xf32>
    %7 = vector.multi_reduction <maximumf>, %6, %cst_6 [0] : vector<4x256xf32> to vector<256xf32>
    %8 = vector.shape_cast %7 : vector<256xf32> to vector<1x256xf32>
    %9 = vector.broadcast %8 : vector<1x256xf32> to vector<4x256xf32>
    %10 = arith.subf %6, %9 : vector<4x256xf32>
    %11 = math.exp %10 : vector<4x256xf32>
    %cst_7 = arith.constant dense<0.000000e+00> : vector<256xf32>
    %12 = vector.multi_reduction <add>, %11, %cst_7 [0] : vector<4x256xf32> to vector<256xf32>
    %13 = vector.shape_cast %12 : vector<256xf32> to vector<1x256xf32>
    %14 = tpu.reciprocal %13 {approx = true} : vector<1x256xf32> -> vector<1x256xf32>
    %15 = vector.broadcast %14 : vector<1x256xf32> to vector<4x256xf32>
    %16 = arith.mulf %11, %15 : vector<4x256xf32>
    %c0_8 = arith.constant 0 : index
    %c0_9 = arith.constant 0 : index
    %c0_10 = arith.constant 0 : index
    %17 = vector.load %arg5[%c0_8, %c0_9, %c0_10] : memref<1x4x256xf32, #tpu.memory_space<vmem>>, vector<1x4x256xf32>
    %18 = vector.shape_cast %17 : vector<1x4x256xf32> to vector<4x256xf32>
    %19 = vector.shape_cast %16 : vector<4x256xf32> to vector<1x4x256xf32>
    tpu.vector_store %arg5[%c0_8, %c0_9, %c0_10], %19 {strides = array<i32>} : memref<1x4x256xf32, #tpu.memory_space<vmem>>, vector<1x4x256xf32>,
    return
  }
  func.func @transform_0(%arg0: i32, %arg1: i32) -> (i32, i32, i32) {
    %c0_i32 = arith.constant 0 : i32
    %c0_i32_0 = arith.constant 0 : i32
    return %arg0, %c0_i32, %arg1 : i32, i32, i32
  }
  func.func @transform_1(%arg0: i32, %arg1: i32) -> (i32, i32) {
    %c0_i32 = arith.constant 0 : i32
    %c0_i32_0 = arith.constant 0 : i32
    %c0_i32_1 = arith.constant 0 : i32
    return %c0_i32, %c0_i32_0 : i32, i32
  }
  func.func @transform_2(%arg0: i32, %arg1: i32) -> (i32, i32) {
    %c0_i32 = arith.constant 0 : i32
    %c0_i32_0 = arith.constant 0 : i32
    %c0_i32_1 = arith.constant 0 : i32
    return %c0_i32, %c0_i32_0 : i32, i32
  }
  func.func @transform_3(%arg0: i32, %arg1: i32) -> (i32, i32, i32) {
    %c0_i32 = arith.constant 0 : i32
    %c0_i32_0 = arith.constant 0 : i32
    return %arg0, %c0_i32, %arg1 : i32, i32, i32
  }
}

</mosaic_0001>

<llo_original>
// kernel: tpu_custom_call.1
$region0: #{tpu_custom_call.1}
  #allocation0 [shape = 'u32[]', space=smem, size = 0x4, offset = 0x4, fixed_abs, tag = 'smem constant byte address 0x4 - core index']
  #allocation1 [shape = 'u32[144,128]{1,0:T(1,128)}', space=vmem, size = 0x12000, scoped, tag = 'internal scratch']
  %s0 = inlined_call_operand.vmem [shape: f32[2,12,256], index: 0, kind: input, shape index: {}]
  %s1 = inlined_call_operand.vmem [shape: f32[4,12], index: 1, kind: input, shape index: {}]
  %s2 = inlined_call_operand.vmem [shape: f32[4,1], index: 2, kind: input, shape index: {}]
  %s3 = inlined_call_operand.hbm [shape: f32[2,4,256], index: 3, kind: output, shape index: {}]
  %s4 = sld [smem:[#allocation0]]
  $region45: #{tpu_custom_call.1} parent=0
    _
  %s6 = ssub.s32 1, %s4
  %s7 = scalar_select 0, %s6, %s4
  $region1: #{tpu_custom_call.1} parent=0
    #allocation2 [shape = 'u8[8192]{0}', space=vmem, size = 0x2000, scoped, tag = 'output window, operand 0']
    #allocation3 [shape = 's32[2]{0}', space=sflag, size = 0x8, scoped, tag = 'scoped memory for tpu_custom_call.1']
    %8 = vsyncpa [#allocation3], 0
    %s9 = scalar_lea.sflag [#allocation3], 1
    %10 = vsyncpa %s9, 0
    loop: start=0, step=1, limit=4
    $region2: #{tpu_custom_call.1} parent=1 // loop_pre_header
      _
    $region3: #{tpu_custom_call.1} parent=1 // loop_header
      %s12 = sphi 0, %s16
      %p13 = scmp.ge.s32.totalorder %s12, 4
      %s19 = sphi 0, %s31
      %s20 = sphi 0, %s27
      %s21 = sphi 0, %s19
      %s22 = sphi 0, %s20
      %s23 = sphi 0, %s21
      %s24 = sphi 0, %s22
      %s36 = sphi 0, %s38
      %s39 = sphi 0, %s36
      %s40 = sphi 0, %s39
      %s56 = sphi 0, %s40
      %s60 = sphi 0, %s60
      %s62 = sphi 0, %s60
      %s63 = sphi 0, %s62
      %s77 = sphi 0, %s63
      %s81 = sphi 0, %s81
      %s83 = sphi 0, %s81
      %s84 = sphi 0, %s83
      %s98 = sphi 0, %s84
      %s106 = sphi 0, %s108
      %s109 = sphi 0, %s106
      %s110 = sphi 0, %s109
      %s126 = sphi 0, %s110
    $region4: #{tpu_custom_call.1} parent=1 // loop_header_branch
      %15 = sbr.rel (%p13) target = $region8
    $region5: #{tpu_custom_call.1} parent=1 // loop_body
      %s17 = ssub.s32 %s12, 1
      %s18 = ssub.s32 %s12, 2
      %s25 = sadd.s32 1, %s20
      %p26 = scmp.ge.s32.totalorder %s25, 1
      %s27 = scalar_select %p26, 0, %s25
      %s28 = sadd.s32 1, %s19
      %s29 = scalar_select %p26, %s28, %s19
      %p30 = scmp.ge.s32.totalorder %s29, 2
      %s31 = scalar_select %p30, 0, %s29
      %s32 = ssub.s32 %s19, %s31
      %s33 = ssub.s32 %s20, %s27
      %s34 = sor.u32 %s32, %s33
      %p35 = scmp.eq.s32.totalorder %s34, 0
      %s37 = sadd.s32 %s36, 1
      %s38 = scalar_select %p35, %s36, %s37
      %p41 = pneg %p35
      %p42 = scmp.eq.s32.totalorder %s12, 1
      %p43 = por %p41, %p42
      %p44 = scmp.ne.s32.totalorder %s36, %s39
      %p45 = scmp.eq.s32.totalorder %s12, 0
      %p46 = por %p44, %p45
      %p47 = scmp.ne.s32.totalorder %s36, %s39
      %p48 = scmp.eq.s32.totalorder %s17, 1
      %p49 = por %p47, %p48
      %p50 = scmp.ne.s32.totalorder %s39, %s40
      %p51 = scmp.eq.s32.totalorder %s17, 0
      %p52 = por %p50, %p51
      %p53 = scmp.ne.s32.totalorder %s39, %s40
      %p54 = scmp.eq.s32.totalorder %s18, 1
      %p55 = por %p53, %p54
      %p57 = scmp.ne.s32.totalorder %s40, %s56
      %p58 = scmp.eq.s32.totalorder %s18, 0
      %p59 = por %p57, %p58
      %s61 = sadd.s32 %s60, 1
      %p64 = scmp.eq.s32.totalorder %s12, 1
      %p65 = scmp.ne.s32.totalorder %s60, %s62
      %p66 = scmp.eq.s32.totalorder %s12, 0
      %p67 = por %p65, %p66
      %p68 = scmp.ne.s32.totalorder %s60, %s62
      %p69 = scmp.eq.s32.totalorder %s17, 1
      %p70 = por %p68, %p69
      %p71 = scmp.ne.s32.totalorder %s62, %s63
      %p72 = scmp.eq.s32.totalorder %s17, 0
      %p73 = por %p71, %p72
      %p74 = scmp.ne.s32.totalorder %s62, %s63
      %p75 = scmp.eq.s32.totalorder %s18, 1
      %p76 = por %p74, %p75
      %p78 = scmp.ne.s32.totalorder %s63, %s77
      %p79 = scmp.eq.s32.totalorder %s18, 0
      %p80 = por %p78, %p79
      %s82 = sadd.s32 %s81, 1
      %p85 = scmp.eq.s32.totalorder %s12, 1
      %p86 = scmp.ne.s32.totalorder %s81, %s83
      %p87 = scmp.eq.s32.totalorder %s12, 0
      %p88 = por %p86, %p87
      %p89 = scmp.ne.s32.totalorder %s81, %s83
      %p90 = scmp.eq.s32.totalorder %s17, 1
      %p91 = por %p89, %p90
      %p92 = scmp.ne.s32.totalorder %s83, %s84
      %p93 = scmp.eq.s32.totalorder %s17, 0
      %p94 = por %p92, %p93
      %p95 = scmp.ne.s32.totalorder %s83, %s84
      %p96 = scmp.eq.s32.totalorder %s18, 1
      %p97 = por %p95, %p96
      %p99 = scmp.ne.s32.totalorder %s84, %s98
      %p100 = scmp.eq.s32.totalorder %s18, 0
      %p101 = por %p99, %p100
      %s102 = ssub.s32 %s19, %s31
      %s103 = ssub.s32 %s20, %s27
      %s104 = sor.u32 %s102, %s103
      %p105 = scmp.eq.s32.totalorder %s104, 0
      %s107 = sadd.s32 %s106, 1
      %s108 = scalar_select %p105, %s106, %s107
      %p111 = pneg %p105
      %p112 = scmp.eq.s32.totalorder %s12, 1
      %p113 = por %p111, %p112
      %p114 = scmp.ne.s32.totalorder %s106, %s109
      %p115 = scmp.eq.s32.totalorder %s12, 0
      %p116 = por %p114, %p115
      %p117 = scmp.ne.s32.totalorder %s106, %s109
      %p118 = scmp.eq.s32.totalorder %s17, 1
      %p119 = por %p117, %p118
      %p120 = scmp.ne.s32.totalorder %s109, %s110
      %p121 = scmp.eq.s32.totalorder %s17, 0
      %p122 = por %p120, %p121
      %p123 = scmp.ne.s32.totalorder %s109, %s110
      %p124 = scmp.eq.s32.totalorder %s18, 1
      %p125 = por %p123, %p124
      %p127 = scmp.ne.s32.totalorder %s110, %s126
      %p128 = scmp.eq.s32.totalorder %s18, 0
      %p129 = por %p127, %p128
      %p130 = scmp.le.s32.totalorder 1, %s12
      %p131 = scmp.lt.s32.totalorder %s12, 3
      %p132 = pnand %p130, %p131
      %p133 = pneg %p132
      // Predicated region
      $region9: #{tpu_custom_call.1} parent=5 // pred_check
        _
      $region10: #{tpu_custom_call.1} parent=5 // pred_check_branch
        %135 = sbr.rel (%p132) target = $region12
      $region11: #{tpu_custom_call.1} parent=5 // pred_region
        %s136 = ssub.s32 %s12, 1
        // Predicated region
        $region13: #{tpu_custom_call.1} parent=11 // pred_check
          %p137 = pneg %p73
        $region14: #{tpu_custom_call.1} parent=11 // pred_check_branch
          %139 = sbr.rel (%p137) target = $region16
        $region15: #{tpu_custom_call.1} parent=11 // pred_region
          _
        $region16: #{tpu_custom_call.1} parent=11 // pred_fallthru
          _
        // Predicated region
        $region17: #{tpu_custom_call.1} parent=11 // pred_check
          %p140 = pneg %p94
        $region18: #{tpu_custom_call.1} parent=11 // pred_check_branch
          %142 = sbr.rel (%p140) target = $region20
        $region19: #{tpu_custom_call.1} parent=11 // pred_region
          _
        $region20: #{tpu_custom_call.1} parent=11 // pred_fallthru
          _
      $region12: #{tpu_custom_call.1} parent=5 // pred_fallthru
        _
      %p143 = scmp.lt.s32.totalorder %s12, 2
      // Predicated region
      $region21: #{tpu_custom_call.1} parent=5 // pred_check
        %p144 = pneg %p143
      $region22: #{tpu_custom_call.1} parent=5 // pred_check_branch
        %146 = sbr.rel (%p144) target = $region24
      $region23: #{tpu_custom_call.1} parent=5 // pred_region
        // Predicated region
        $region25: #{tpu_custom_call.1} parent=23 // pred_check
          %p147 = pneg %p46
        $region26: #{tpu_custom_call.1} parent=23 // pred_check_branch
          %149 = sbr.rel (%p147) target = $region28
        $region27: #{tpu_custom_call.1} parent=23 // pred_region
          %s150 = smul.u32 2, %s20
          %p151 = scmp.lt.s32.totalorder %s19, 1
          %s152 = scalar_select %p151, %s19, 1
          %p153 = scmp.lt.s32.totalorder %s150, 1
          %s154 = scalar_select %p153, %s150, 1
          %s155 = smul.addr %s152, 4
          %s156 = sadd.s32 %s154, %s155
          %s157 = smul.addr %s156, 8
          %s158 = scalar_lea.vmem %s0, %s157
          %s159 = smul.u32 2, %s20
        $region28: #{tpu_custom_call.1} parent=23 // pred_fallthru
          _
      $region24: #{tpu_custom_call.1} parent=5 // pred_fallthru
        _
      %p160 = scmp.le.s32.totalorder 1, %s12
      %p161 = scmp.lt.s32.totalorder %s12, 3
      %p162 = pnand %p160, %p161
      %p163 = pneg %p162
      // Predicated region
      $region29: #{tpu_custom_call.1} parent=5 // pred_check
        _
      $region30: #{tpu_custom_call.1} parent=5 // pred_check_branch
        %165 = sbr.rel (%p162) target = $region32
      $region31: #{tpu_custom_call.1} parent=5 // pred_region
        %s166 = ssub.s32 %s12, 1
        %s167 = smul.u32 2, %s22
        %p168 = scmp.lt.s32.totalorder %s21, 1
        %s169 = scalar_select %p168, %s21, 1
        %p170 = scmp.lt.s32.totalorder %s167, 1
        %s171 = scalar_select %p170, %s167, 1
        %s172 = smul.addr %s169, 4
        %s173 = sadd.s32 %s171, %s172
        %s174 = smul.addr %s173, 8
        %s175 = scalar_lea.vmem %s0, %s174
        %p176 = pneg %p52
        %p177 = pneg %p49
        %p178 = pneg %p73
        %p179 = pneg %p70
        %p180 = pneg %p94
        %p181 = pneg %p91
        %p182 = pneg %p122
        %p183 = pneg %p119
        %s184 = sand.u32 %s109, 1
        %s185 = scalar_lea.sflag [#allocation3], %s184
        %s186 = sand.u32 %s109, 1
        %s187 = smul.addr %s186, 8
        %s188 = scalar_lea.vmem [#allocation2], %s187
        %s189 = smul.u32 2, %s22
        %p190 = scmp.lt.s32.totalorder %s21, 1
        %s191 = scalar_select %p190, %s21, 1
        %p192 = scmp.lt.s32.totalorder %s189, 1
        %s193 = scalar_select %p192, %s189, 1
        %s194 = smul.addr %s191, 4
        %s195 = sadd.s32 %s193, %s194
        %s196 = smul.addr %s195, 8
        %s197 = scalar_lea.vmem %s0, %s196
        %s198 = smul.u32 2, %s22
        %s199 = smul.u32 2, %s22
        %v200 = vld [vmem:[%s1] sm:$0xf]
        %v201 = vld [vmem:[%s2] sm:$0xf]
        %v202 = vld [vmem:[%s197] sm:$0xff]
        %v203 = vld [vmem:[%s197 + $0x8] sm:$0xff]
        %v204 = vld [vmem:[%s197 + $0x10] sm:$0xf]
        %v205 = vld [vmem:[%s197 + $0x18] sm:$0xf]
        %207 = vset.pattern.permute.xlu0 0
        %208 = vperm.xlu0 %207, %v201
        %v209 = vpop.permute.xlu0 %208
        %vm211 = vcmask 97280
        %v213 = vsel %vm211, %v200, 0
        %vm215 = vcmask 1043456
        %v217 = vsel %vm215, %v204, 0
        %v220 = vsel %vm215, %v205, 0
        %222 = vmatprep.subr.mxu0 0.0
        %223 = vmatpush1.msra.mxu0 0.0
        %224 = vmatprep.subr.mxu0 0.0
        %225 = vmatpush1.msra.mxu0 0.0
        %226 = vmatprep.subr.mxu0 0.0
        %227 = vmatpush1.msra.mxu0 0.0
        %228 = vmatprep.subr.mxu0 0.0
        %229 = vmatpush1.msra.mxu0 0.0
        %230 = vmatprep.subr.mxu0 0.0
        %231 = vmatpush1.msra.mxu0 0.0
        %232 = vmatprep.subr.mxu0 0.0
        %233 = vmatpush1.msra.mxu0 0.0
        %234 = vmatprep.subr.mxu0 0.0
        %235 = vmatpush1.msra.mxu0 0.0
        %236 = vmatprep.subr.mxu0 0.0
        %237 = vmatpush1.msra.mxu0 0.0
        %238 = vmatprep.subr.mxu0 0.0
        %239 = vmatpush1.msra.mxu0 0.0
        %240 = vmatprep.subr.mxu0 0.0
        %241 = vmatpush1.msra.mxu0 0.0
        %242 = vmatprep.subr.mxu0 0.0
        %243 = vmatpush1.msra.mxu0 0.0
        %244 = vmatprep.subr.mxu0 0.0
        %245 = vmatpush1.msra.mxu0 0.0
        %246 = vmatprep.subr.mxu0 0.0
        %247 = vmatpush1.msra.mxu0 0.0
        %248 = vmatprep.subr.mxu0 0.0
        %249 = vmatpush1.msra.mxu0 0.0
        %250 = vmatprep.subr.mxu0 %v220
        %251 = vmatpush1.msra.mxu0 %v217
        %252 = vmatprep.subr.mxu0 %v203
        %253 = vmatpush1.msra.mxu0 %v202
        %254 = vmatprep.subr.mxu0 0.0
        %255 = vmatpush2.msra.mxu0 0.0
        %256 = vmatprep.subr.mxu0 0.0
        %257 = vmatpush2.msra.mxu0 0.0
        %258 = vmatprep.subr.mxu0 0.0
        %259 = vmatpush2.msra.mxu0 0.0
        %260 = vmatprep.subr.mxu0 0.0
        %261 = vmatpush2.msra.mxu0 0.0
        %262 = vmatprep.subr.mxu0 0.0
        %263 = vmatpush2.msra.mxu0 0.0
        %264 = vmatprep.subr.mxu0 0.0
        %265 = vmatpush2.msra.mxu0 0.0
        %266 = vmatprep.subr.mxu0 0.0
        %267 = vmatpush2.msra.mxu0 0.0
        %268 = vmatprep.subr.mxu0 0.0
        %269 = vmatpush2.msra.mxu0 0.0
        %270 = vmatprep.subr.mxu0 0.0
        %271 = vmatpush2.msra.mxu0 0.0
        %272 = vmatprep.subr.mxu0 0.0
        %273 = vmatpush2.msra.mxu0 0.0
        %274 = vmatprep.subr.mxu0 0.0
        %275 = vmatpush2.msra.mxu0 0.0
        %276 = vmatprep.subr.mxu0 0.0
        %277 = vmatpush2.msra.mxu0 0.0
        %278 = vmatprep.subr.mxu0 0.0
        %279 = vmatpush2.msra.mxu0 0.0
        %280 = vmatprep.subr.mxu0 0.0
        %281 = vmatpush2.msra.mxu0 0.0
        %282 = vmatprep.subr.mxu0 0.0
        %283 = vmatpush2.msra.mxu0 0.0
        %284 = vmatprep.subr.mxu0 0.0
        %285 = vmatpush2.msra.mxu0 0.0
        %286 = vmatprep.mubr.f32.mxu0 0.0
        %287 = vmatmul.mubr.f32.gmra.mxu0 %v213
        %v288 = vpop.f32.mrf.mxu0
        %v289 = vadd.f32 %v209, %v288
        %v290 = vpop.f32.mrf.mxu0
        %v291 = vadd.f32 %v209, %v290
        %292 = vdwg.mxu0
        %v293 = vsel %vm215, %v289, -inf
        %v294 = vrot.slane %v293, 4
        %v295 = vmax.f32 %v293, %v294
        %v296 = vrot.slane %v295, 2
        %v297 = vmax.f32 %v295, %v296
        %v298 = vrot.slane %v297, 1
        %v299 = vmax.f32 %v297, %v298
        %v300 = vsel %vm215, %v291, -inf
        %v301 = vrot.slane %v300, 4
        %v302 = vmax.f32 %v300, %v301
        %v303 = vrot.slane %v302, 2
        %v304 = vmax.f32 %v302, %v303
        %v305 = vrot.slane %v304, 1
        %v306 = vmax.f32 %v304, %v305
        %v307 = vsub.f32 %v289, %v299
        %v308 = vsub.f32 %v291, %v306
        %v309 = vmul.f32 %v307, 1.442695
        %v310 = vpow.pop %v309
        %v311 = vmul.f32 %v308, 1.442695
        %v312 = vpow.pop %v311
        %v313 = vsel %vm215, %v310, 0.0
        %v314 = vrot.slane %v313, 4
        %v315 = vadd.f32 %v313, %v314
        %v316 = vrot.slane %v315, 2
        %v317 = vadd.f32 %v315, %v316
        %v318 = vrot.slane %v317, 1
        %v319 = vadd.f32 %v317, %v318
        %v320 = vsel %vm215, %v312, 0.0
        %v321 = vrot.slane %v320, 4
        %v322 = vadd.f32 %v320, %v321
        %v323 = vrot.slane %v322, 2
        %v324 = vadd.f32 %v322, %v323
        %v325 = vrot.slane %v324, 1
        %v326 = vadd.f32 %v324, %v325
        %v327 = vrcp.pop %v319
        %v328 = vrcp.pop %v326
        %v329 = vmul.f32 %v310, %v327
        %v330 = vmul.f32 %v312, %v328
        %v333 = vcombine.low %v329, %v330
        %335 = vst [vmem:[%s188] sm:$0xff] %v333
        %s336 = sand.u32 %s109, 1
        %s337 = scalar_lea.sflag [#allocation3], %s336
        %s338 = sand.u32 %s109, 1
        %s339 = smul.addr %s338, 8
        %s340 = scalar_lea.vmem [#allocation2], %s339
        // Predicated region
        $region33: #{tpu_custom_call.1} parent=31 // pred_check
          %p341 = pneg %p119
        $region34: #{tpu_custom_call.1} parent=31 // pred_check_branch
          %343 = sbr.rel (%p341) target = $region36
        $region35: #{tpu_custom_call.1} parent=31 // pred_region
          %s344 = smul.u32 2, %s22
          %s346 = ssub.s32 128, 128
          %347 = vsyncadd %s337, %s346
          %s348 = smul.addr %s21, 2
          %s349 = sadd.s32 %s344, %s348
          %s350 = smul.addr %s349, 64
          %s351 = scalar_lea.hbm %s3, %s350
          %s353 = sshll.u32 %s340, 4
          %s354 = int_to_ptr.vmem [resolvable:$true] %s353
          %356 = dma.vmem_to_hbm [thread:$0]  %s354, 128, %s351, %s337
        $region36: #{tpu_custom_call.1} parent=31 // pred_fallthru
          _
      $region32: #{tpu_custom_call.1} parent=5 // pred_fallthru
        _
      %p357 = scmp.le.s32.totalorder 2, %s12
      // Predicated region
      $region37: #{tpu_custom_call.1} parent=5 // pred_check
        %p358 = pneg %p357
      $region38: #{tpu_custom_call.1} parent=5 // pred_check_branch
        %360 = sbr.rel (%p358) target = $region40
      $region39: #{tpu_custom_call.1} parent=5 // pred_region
        %s361 = ssub.s32 %s12, 2
        // Predicated region
        $region41: #{tpu_custom_call.1} parent=39 // pred_check
          %p362 = pneg %p125
        $region42: #{tpu_custom_call.1} parent=39 // pred_check_branch
          %364 = sbr.rel (%p362) target = $region44
        $region43: #{tpu_custom_call.1} parent=39 // pred_region
          %s365 = sand.u32 %s110, 1
          %s366 = scalar_lea.sflag [#allocation3], %s365
          %s367 = sand.u32 %s110, 1
          %s368 = smul.addr %s367, 8
          %s369 = scalar_lea.vmem [#allocation2], %s368
          %370 = dma.done %s366, 128
        $region44: #{tpu_custom_call.1} parent=39 // pred_fallthru
          _
      $region40: #{tpu_custom_call.1} parent=5 // pred_fallthru
        _
    $region6: #{tpu_custom_call.1} parent=1 // loop_footer
      %s16 = sadd.s32 1, %s12
    $region7: #{tpu_custom_call.1} parent=1 // loop_footer_branch
      %11 = sbr.rel target = $region3
    $region8: #{tpu_custom_call.1} parent=1 // loop_exit
      _
    %371 = vsyncpa [#allocation3], 1
    %s372 = scalar_lea.sflag [#allocation3], 1
    %373 = vsyncpa %s372, 1

</llo_original>
